<compile_context>
chip_gen: v7x
topology: tpu7x:2x2x1
jax: 0.10.0
libtpu: 0.0.40
codegen_flags: <defaults>
</compile_context>

<pallas_src>
import math
import numpy as np
import jax
import jax.numpy as jnp
from jax.experimental import pallas as pl
from jax.experimental.pallas import tpu as pltpu

_BINOMIAL = {
    1: [1.0],
    2: [1.0, 1.0],
    3: [1.0, 2.0, 1.0],
    4: [1.0, 3.0, 3.0, 1.0],
    5: [1.0, 4.0, 6.0, 4.0, 1.0],
    6: [1.0, 5.0, 10.0, 10.0, 5.0, 1.0],
    7: [1.0, 6.0, 15.0, 20.0, 15.0, 6.0, 1.0],
}

_PAD_MODE = {'reflect': 'reflect', 'refl': 'reflect',
             'repl': 'edge', 'replicate': 'edge', 'zero': 'constant'}


def _pad_matrix(n, lo, hi, mode):
    """(n+lo+hi, n) matrix P such that P @ v == pad(v, (lo, hi), mode). Padding is linear."""
    P = np.zeros((n + lo + hi, n), np.float64)
    for p in range(n + lo + hi):
        o = p - lo
        if mode == 'constant':           # zero pad: padded rows stay all-zero
            if 0 <= o < n:
                P[p, o] = 1.0
        elif mode == 'edge':             # replicate
            P[p, min(max(o, 0), n - 1)] = 1.0
        else:                            # reflect (single reflection, pad < dim, as in torch)
            if o < 0:
                o = -o
            if o >= n:
                o = 2 * (n - 1) - o
            P[p, o] = 1.0
    return P


def _blur_matrices(H, W, filt_size, stride, pads, mode):
    """Ah (Ho,H), AwT (W,Wo) with normalized binomial taps, stride and padding folded in."""
    p_l, p_r, p_t, p_b = pads
    Hp, Wp = H + p_t + p_b, W + p_l + p_r
    Ho = (Hp - filt_size) // stride + 1
    Wo = (Wp - filt_size) // stride + 1
    a = np.asarray(_BINOMIAL[filt_size], np.float64)
    a = a / a.sum()
    Ah_pad = np.zeros((Ho, Hp), np.float64)
    for i in range(Ho):
        Ah_pad[i, stride * i: stride * i + filt_size] = a
    AwT_pad = np.zeros((Wp, Wo), np.float64)
    for j in range(Wo):
        AwT_pad[stride * j: stride * j + filt_size, j] = a
    Ah = Ah_pad @ _pad_matrix(H, p_t, p_b, mode)            # (Ho, H)
    AwT = _pad_matrix(W, p_l, p_r, mode).T @ AwT_pad        # (W, Wo)
    return Ah, AwT, Ho, Wo


def _vmem_plan():
    """(target input-block bytes, vmem_limit_bytes), derived from the chip's VMEM capacity."""
    cap = 64 * 1024 * 1024                      # conservative default (v7x per-TC VMEM)
    try:
        info = pltpu.get_tpu_info()
        cap = int(getattr(info, "vmem_capacity_bytes", cap)) or cap
    except Exception:
        pass
    vmem_limit = int(min(96 * 1024 * 1024, max(32 * 1024 * 1024, (3 * cap) // 4)))
    target_block = int(min(16 * 1024 * 1024, max(2 * 1024 * 1024, cap // 12)))
    return target_block, vmem_limit


def _choose_tc(C, N, per_channel_bytes, target_bytes, multiple=1):
    """Channels per block: byte target, then a grid-step floor (2 TCs on v7x), then layout rounding."""
    tc = max(1, min(C, int(target_bytes) // max(1, int(per_channel_bytes))))
    min_steps = 4                                # keep both v7x TensorCores fed + pipeline warm
    while tc > 1 and N * ((C + tc - 1) // tc) < min_steps:
        tc = max(1, tc // 2)
    if C <= multiple:
        return C                                 # block dim equals full array dim -> always legal
    tc = max(multiple, (tc // multiple) * multiple)
    return min(tc, C)


def _kron_kernel(x_ref, k_ref, o_ref):
    # x_ref: (1, tc, H*W)   k_ref: (H*W, Ho*Wo)   o_ref: (1, tc, Ho*Wo)
    o_ref[0] = jnp.dot(x_ref[0], k_ref[...],
                       preferred_element_type=jnp.float32).astype(o_ref.dtype)


def _separable_kernel(x_ref, awt_ref, ah_ref, o_ref):
    # x_ref: (1, tc, H, W)   awt_ref: (W, Wo)   ah_ref: (Ho, Hp)   o_ref: (1, tc, Ho, Wo)
    x = x_ref[0]                          # activation dtype straight to the MXU
    awt = awt_ref[...]
    ah = ah_ref[...]
    tc, h, w = x.shape
    ho, hp = ah.shape
    wo = awt.shape[1]

    if hp != h:
        # Zero-pad H to the sublane packing so the (tc, Hp, W) -> (tc*Hp, W) merge is layout-free;
        # Ah has matching zero columns, so the result is unchanged.
        x = jnp.concatenate([x, jnp.zeros((tc, hp - h, w), dtype=x.dtype)], axis=1)

    # Horizontal blur + stride subsample: one tall MXU matmul, f32 accumulation.
    t = jnp.dot(x.reshape(tc * hp, w), awt, preferred_element_type=jnp.float32)
    # Keep the vertical pass in the activation dtype (bf16 MXU is 3-6x cheaper than f32).
    t = t.reshape(tc, hp, wo).astype(x.dtype)

    # Vertical blur + stride subsample: batched matmul over the channel block, f32 accumulation.
    # TODO(synk): a single wide (Ho, Hp) @ (Hp, tc*Wo) matmul would amortize MXU lane padding when
    # Wo << 128, but needs a sublane<->lane merge (relayout unless Wo % 128 == 0); measure first.
    ahb = jnp.broadcast_to(ah[None], (tc, ho, hp))
    y = jnp.einsum('coh,chq->coq', ahb, t, preferred_element_type=jnp.float32)
    o_ref[0] = y.astype(o_ref.dtype)


def downsample(x, *, filt_size=3, stride=2, pad_type='reflect', pad_off=0):
    """JAX/Pallas equivalent of pasa.Downsample.forward (NCHW input)."""
    if filt_size not in _BINOMIAL:
        raise ValueError(f"filt_size must be in 1..7, got {filt_size}")
    N, C, H, W = x.shape
    mode = _PAD_MODE[pad_type]
    p0 = int(1.0 * (filt_size - 1) / 2) + pad_off
    p1 = int(math.ceil(1.0 * (filt_size - 1) / 2)) + pad_off
    pads = (p0, p1, p0, p1)              # (left, right, top, bottom), module ordering

    if filt_size == 1:
        # TODO(synk): filt_size==1 is pure strided slicing (no reduction); kept as JAX glue.
        xp = x if pad_off == 0 else jnp.pad(
            x, ((0, 0), (0, 0), (pads[2], pads[3]), (pads[0], pads[1])), mode=mode)
        return xp[:, :, ::stride, ::stride]

    if mode == 'reflect' and (max(pads[2], pads[3]) >= H or max(pads[0], pads[1]) >= W):
        raise ValueError("reflect padding requires pad < spatial dim (as in torch)")

    Ah_np, AwT_np, Ho, Wo = _blur_matrices(H, W, filt_size, stride, pads, mode)

    dtype = x.dtype
    itemsize = np.dtype(dtype).itemsize
    target_block_bytes, vmem_limit = _vmem_plan()
    sub_pack = max(8, 32 // itemsize)            # sublane packing: 8 f32, 16 bf16, 32 int8
    dim_sem = ("parallel", "parallel")

    use_kron = (H * W <= 2048 and Ho * Wo <= 2048
                and H * W * Ho * Wo * itemsize <= 4 * 1024 * 1024)

    if use_kron:
        # Small feature maps: fold both passes into one operator
        #   K[h*W + w, o*Wo + q] = Ah[o, h] * AwT[w, q]    ->    out_flat = x_flat @ K
        K = jnp.asarray(np.kron(Ah_np.T, AwT_np).astype(np.float32)).astype(dtype)
        x_flat = x.reshape(N, C, H * W)
        tc = _choose_tc(C, N, H * W * itemsize, target_block_bytes, multiple=sub_pack)
        n_cblocks = pl.cdiv(C, tc)
        flops = 2 * N * C * (H * W) * (Ho * Wo)
        bytes_accessed = (N * C * (H * W + Ho * Wo) + H * W * Ho * Wo) * itemsize
        out_flat = pl.pallas_call(
            _kron_kernel,
            out_shape=jax.ShapeDtypeStruct((N, C, Ho * Wo), dtype),
            grid=(N, n_cblocks),
            in_specs=[
                pl.BlockSpec((1, tc, H * W), lambda n, c: (n, c, 0)),
                pl.BlockSpec((H * W, Ho * Wo), lambda n, c: (0, 0)),
            ],
            out_specs=pl.BlockSpec((1, tc, Ho * Wo), lambda n, c: (n, c, 0)),
            compiler_params=pltpu.CompilerParams(
                dimension_semantics=dim_sem, vmem_limit_bytes=vmem_limit),
            cost_estimate=pl.CostEstimate(flops=flops, transcendentals=0,
                                          bytes_accessed=bytes_accessed),
        )(x_flat, K)
        return out_flat.reshape(N, C, Ho, Wo)

    # Separable path. Ah gets zero columns up to Hp (sublane-packing multiple) so the kernel's
    # tall-matmul reshape is always layout-free for the activation dtype.
    Hp = ((H + sub_pack - 1) // sub_pack) * sub_pack
    Ah_p = np.zeros((Ho, Hp), np.float64)
    Ah_p[:, :H] = Ah_np
    AwT = jnp.asarray(AwT_np.astype(np.float32)).astype(dtype)   # MXU in activation dtype
    Ah = jnp.asarray(Ah_p.astype(np.float32)).astype(dtype)
    # TODO(synk): optional opt-in bf16 compute for f32 activations (v5e MXU headroom) — numerics change.

    tc = _choose_tc(C, N, H * W * itemsize, target_block_bytes, multiple=1)
    n_cblocks = pl.cdiv(C, tc)
    flops = 2 * N * C * (Hp * W * Wo + Hp * Ho * Wo)
    bytes_accessed = (N * C * (H * W + Ho * Wo) + W * Wo + Ho * Hp) * itemsize
    # TODO(synk): for Wo < 128 a flattened (N, C, Ho*Wo) output slab would give lane-dense
    # unmasked stores; needs an in-kernel (Ho, Wo) merge — measure relayout vs store savings.
    return pl.pallas_call(
        _separable_kernel,
        out_shape=jax.ShapeDtypeStruct((N, C, Ho, Wo), dtype),
        grid=(N, n_cblocks),
        in_specs=[
            pl.BlockSpec((1, tc, H, W), lambda n, c: (n, c, 0, 0)),
            pl.BlockSpec((W, Wo), lambda n, c: (0, 0)),
            pl.BlockSpec((Ho, Hp), lambda n, c: (0, 0)),
        ],
        out_specs=pl.BlockSpec((1, tc, Ho, Wo), lambda n, c: (n, c, 0, 0)),
        compiler_params=pltpu.CompilerParams(
            dimension_semantics=dim_sem, vmem_limit_bytes=vmem_limit),
        cost_estimate=pl.CostEstimate(flops=flops, transcendentals=0,
                                      bytes_accessed=bytes_accessed),
    )(x, AwT, Ah)


def _reference(x, filt_size=3, stride=2, pad_type='reflect'):
    """Pure-JAX depthwise conv reference mirroring F.conv2d(pad(x), filt, stride, groups=C)."""
    N, C, H, W = x.shape
    a = np.asarray(_BINOMIAL[filt_size], np.float32)
    f2 = a[:, None] * a[None, :]
    f2 = f2 / f2.sum()
    w = jnp.asarray(np.tile(f2[None, None], (C, 1, 1, 1)))   # (C, 1, fs, fs)
    p0 = int((filt_size - 1) / 2)
    p1 = int(math.ceil((filt_size - 1) / 2))
    xp = jnp.pad(x, ((0, 0), (0, 0), (p0, p1), (p0, p1)), mode=_PAD_MODE[pad_type])
    return jax.lax.conv_general_dilated(
        xp, w, window_strides=(stride, stride), padding='VALID',
        dimension_numbers=('NCHW', 'OIHW', 'NCHW'), feature_group_count=C)


if __name__ == "__main__":
    # Small map -> Kron path (f32).
    x = jax.random.normal(jax.random.PRNGKey(0), (2, 4, 16, 16), dtype=jnp.float32)
    out = jax.block_until_ready(downsample(x, pad_type='reflect', filt_size=3, stride=2))
    ref = jax.block_until_ready(_reference(x, filt_size=3, stride=2, pad_type='reflect'))
    assert out.shape == (2, 4, 8, 8), out.shape
    assert jnp.allclose(out, ref, atol=1e-5, rtol=1e-5), float(jnp.max(jnp.abs(out - ref)))

    # Odd spatial dims + folded reflect boundary (Kron path).
    x2 = jax.random.normal(jax.random.PRNGKey(1), (1, 3, 15, 13), dtype=jnp.float32)
    out2 = jax.block_until_ready(downsample(x2, pad_type='reflect', filt_size=3, stride=2))
    ref2 = jax.block_until_ready(_reference(x2, filt_size=3, stride=2, pad_type='reflect'))
    assert out2.shape == ref2.shape, (out2.shape, ref2.shape)
    assert jnp.allclose(out2, ref2, atol=1e-5, rtol=1e-5), float(jnp.max(jnp.abs(out2 - ref2)))

    # Larger map -> separable path (f32, replicate pad, filt 5).
    x3 = jax.random.normal(jax.random.PRNGKey(2), (1, 8, 48, 48), dtype=jnp.float32)
    out3 = jax.block_until_ready(downsample(x3, pad_type='replicate', filt_size=5, stride=2))
    ref3 = jax.block_until_ready(_reference(x3, filt_size=5, stride=2, pad_type='replicate'))
    assert out3.shape == ref3.shape, (out3.shape, ref3.shape)
    assert jnp.allclose(out3, ref3, atol=1e-4, rtol=1e-4), float(jnp.max(jnp.abs(out3 - ref3)))

    # bf16 separable path with H % 16 != 0 (exercises the in-kernel H zero-pad + bf16 MXU path).
    x4 = jax.random.normal(jax.random.PRNGKey(3), (1, 8, 56, 48)).astype(jnp.bfloat16)
    out4 = jax.block_until_ready(downsample(x4, pad_type='reflect', filt_size=3, stride=2))
    ref4 = jax.block_until_ready(_reference(x4.astype(jnp.float32), filt_size=3, stride=2,
                                            pad_type='reflect'))
    assert out4.shape == ref4.shape and out4.dtype == jnp.bfloat16
    assert jnp.allclose(out4.astype(jnp.float32), ref4, atol=3e-2, rtol=3e-2), \
        float(jnp.max(jnp.abs(out4.astype(jnp.float32) - ref4)))

    print("KERNEL_OK")
</pallas_src>

<mosaic_0001>
module attributes {stable_mosaic.version = 11 : i64} {
  func.func @_kron_kernel(%arg0: i32, %arg1: i32, %arg2: memref<1x4x256xf32, #tpu.memory_space<vmem>>, %arg3: memref<256x64xf32, #tpu.memory_space<vmem>>, %arg4: memref<1x4x64xf32, #tpu.memory_space<vmem>>) attributes {dimension_semantics = [#tpu.dimension_semantics<parallel>, #tpu.dimension_semantics<parallel>], iteration_bounds = array<i64: 2, 1>, scalar_prefetch = 0 : i64, scratch_operands = 0 : i64, tpu.core_type = #tpu.core_type<tc>, window_params = [{transform_indices = @transform_0, window_bounds = array<i64: 1, 4, 256>}, {pipeline_mode = #tpu.pipeline_mode<synchronous>, transform_indices = @transform_1, window_bounds = array<i64: 256, 64>}, {transform_indices = @transform_2, window_bounds = array<i64: 1, 4, 64>}]} {
    %c0 = arith.constant 0 : index
    %c0_0 = arith.constant 0 : index
    %c0_1 = arith.constant 0 : index
    %0 = vector.load %arg2[%c0, %c0_0, %c0_1] : memref<1x4x256xf32, #tpu.memory_space<vmem>>, vector<1x4x256xf32>
    %1 = vector.shape_cast %0 : vector<1x4x256xf32> to vector<4x256xf32>
    %c0_2 = arith.constant 0 : index
    %c0_3 = arith.constant 0 : index
    %2 = vector.load %arg3[%c0_2, %c0_3] : memref<256x64xf32, #tpu.memory_space<vmem>>, vector<256x64xf32>
    %cst = arith.constant dense<0.000000e+00> : vector<4x64xf32>
    %3 = tpu.matmul %1, %2, %cst {dimension_numbers = #tpu.dot_dimension_numbers<[1], [0], [0], [1], [0, 0, 1, 1], [], []>} : vector<4x256xf32>, vector<256x64xf32>, vector<4x64xf32> -> vector<4x64xf32>
    %c0_4 = arith.constant 0 : index
    %c0_5 = arith.constant 0 : index
    %c0_6 = arith.constant 0 : index
    %4 = vector.load %arg4[%c0_4, %c0_5, %c0_6] : memref<1x4x64xf32, #tpu.memory_space<vmem>>, vector<1x4x64xf32>
    %5 = vector.shape_cast %4 : vector<1x4x64xf32> to vector<4x64xf32>
    %6 = vector.shape_cast %3 : vector<4x64xf32> to vector<1x4x64xf32>
    tpu.vector_store %arg4[%c0_4, %c0_5, %c0_6], %6 {strides = array<i32>} : memref<1x4x64xf32, #tpu.memory_space<vmem>>, vector<1x4x64xf32>,
    return
  }
  func.func @transform_0(%arg0: i32, %arg1: i32) -> (i32, i32, i32) {
    %c0_i32 = arith.constant 0 : i32
    %c0_i32_0 = arith.constant 0 : i32
    return %arg0, %arg1, %c0_i32 : i32, i32, i32
  }
  func.func @transform_1(%arg0: i32, %arg1: i32) -> (i32, i32) {
    %c0_i32 = arith.constant 0 : i32
    %c0_i32_0 = arith.constant 0 : i32
    %c0_i32_1 = arith.constant 0 : i32
    return %c0_i32, %c0_i32_0 : i32, i32
  }
  func.func @transform_2(%arg0: i32, %arg1: i32) -> (i32, i32, i32) {
    %c0_i32 = arith.constant 0 : i32
    %c0_i32_0 = arith.constant 0 : i32
    return %arg0, %arg1, %c0_i32 : i32, i32, i32
  }
}

</mosaic_0001>

<llo_original>
// kernel: tpu_custom_call.1
$region0: #{tpu_custom_call.1}
  #allocation0 [shape = 'u32[]', space=smem, size = 0x4, offset = 0x4, fixed_abs, tag = 'smem constant byte address 0x4 - core index']
  #allocation1 [shape = 'u32[144,128]{1,0:T(1,128)}', space=vmem, size = 0x12000, scoped, tag = 'internal scratch']
  %s0 = inlined_call_operand.vmem [shape: f32[2,4,256], index: 0, kind: input, shape index: {}]
  %s1 = inlined_call_operand.vmem [shape: f32[256,64], index: 1, kind: input, shape index: {}]
  %s2 = inlined_call_operand.hbm [shape: f32[2,4,64], index: 2, kind: output, shape index: {}]
  %s3 = sld [smem:[#allocation0]]
  $region41: #{tpu_custom_call.1} parent=0
    _
  %s5 = ssub.s32 1, %s3
  %s6 = scalar_select 0, %s5, %s3
  $region1: #{tpu_custom_call.1} parent=0
    #allocation2 [shape = 'u8[4096]{0}', space=vmem, size = 0x1000, scoped, tag = 'output window, operand 0']
    #allocation3 [shape = 's32[2]{0}', space=sflag, size = 0x8, scoped, tag = 'scoped memory for tpu_custom_call.1']
    %7 = vsyncpa [#allocation3], 0
    %s8 = scalar_lea.sflag [#allocation3], 1
    %9 = vsyncpa %s8, 0
    loop: start=0, step=1, limit=4
    $region2: #{tpu_custom_call.1} parent=1 // loop_pre_header
      _
    $region3: #{tpu_custom_call.1} parent=1 // loop_header
      %s11 = sphi 0, %s15
      %p12 = scmp.ge.s32.totalorder %s11, 4
      %s18 = sphi 0, %s30
      %s19 = sphi 0, %s26
      %s20 = sphi 0, %s18
      %s21 = sphi 0, %s19
      %s22 = sphi 0, %s20
      %s23 = sphi 0, %s21
      %s35 = sphi 0, %s37
      %s38 = sphi 0, %s35
      %s39 = sphi 0, %s38
      %s55 = sphi 0, %s39
      %s59 = sphi 0, %s59
      %s61 = sphi 0, %s59
      %s62 = sphi 0, %s61
      %s76 = sphi 0, %s62
      %s84 = sphi 0, %s86
      %s87 = sphi 0, %s84
      %s88 = sphi 0, %s87
      %s104 = sphi 0, %s88
    $region4: #{tpu_custom_call.1} parent=1 // loop_header_branch
      %14 = sbr.rel (%p12) target = $region8
    $region5: #{tpu_custom_call.1} parent=1 // loop_body
      %s16 = ssub.s32 %s11, 1
      %s17 = ssub.s32 %s11, 2
      %s24 = sadd.s32 1, %s19
      %p25 = scmp.ge.s32.totalorder %s24, 1
      %s26 = scalar_select %p25, 0, %s24
      %s27 = sadd.s32 1, %s18
      %s28 = scalar_select %p25, %s27, %s18
      %p29 = scmp.ge.s32.totalorder %s28, 2
      %s30 = scalar_select %p29, 0, %s28
      %s31 = ssub.s32 %s18, %s30
      %s32 = ssub.s32 %s19, %s26
      %s33 = sor.u32 %s31, %s32
      %p34 = scmp.eq.s32.totalorder %s33, 0
      %s36 = sadd.s32 %s35, 1
      %s37 = scalar_select %p34, %s35, %s36
      %p40 = pneg %p34
      %p41 = scmp.eq.s32.totalorder %s11, 1
      %p42 = por %p40, %p41
      %p43 = scmp.ne.s32.totalorder %s35, %s38
      %p44 = scmp.eq.s32.totalorder %s11, 0
      %p45 = por %p43, %p44
      %p46 = scmp.ne.s32.totalorder %s35, %s38
      %p47 = scmp.eq.s32.totalorder %s16, 1
      %p48 = por %p46, %p47
      %p49 = scmp.ne.s32.totalorder %s38, %s39
      %p50 = scmp.eq.s32.totalorder %s16, 0
      %p51 = por %p49, %p50
      %p52 = scmp.ne.s32.totalorder %s38, %s39
      %p53 = scmp.eq.s32.totalorder %s17, 1
      %p54 = por %p52, %p53
      %p56 = scmp.ne.s32.totalorder %s39, %s55
      %p57 = scmp.eq.s32.totalorder %s17, 0
      %p58 = por %p56, %p57
      %s60 = sadd.s32 %s59, 1
      %p63 = scmp.eq.s32.totalorder %s11, 1
      %p64 = scmp.ne.s32.totalorder %s59, %s61
      %p65 = scmp.eq.s32.totalorder %s11, 0
      %p66 = por %p64, %p65
      %p67 = scmp.ne.s32.totalorder %s59, %s61
      %p68 = scmp.eq.s32.totalorder %s16, 1
      %p69 = por %p67, %p68
      %p70 = scmp.ne.s32.totalorder %s61, %s62
      %p71 = scmp.eq.s32.totalorder %s16, 0
      %p72 = por %p70, %p71
      %p73 = scmp.ne.s32.totalorder %s61, %s62
      %p74 = scmp.eq.s32.totalorder %s17, 1
      %p75 = por %p73, %p74
      %p77 = scmp.ne.s32.totalorder %s62, %s76
      %p78 = scmp.eq.s32.totalorder %s17, 0
      %p79 = por %p77, %p78
      %s80 = ssub.s32 %s18, %s30
      %s81 = ssub.s32 %s19, %s26
      %s82 = sor.u32 %s80, %s81
      %p83 = scmp.eq.s32.totalorder %s82, 0
      %s85 = sadd.s32 %s84, 1
      %s86 = scalar_select %p83, %s84, %s85
      %p89 = pneg %p83
      %p90 = scmp.eq.s32.totalorder %s11, 1
      %p91 = por %p89, %p90
      %p92 = scmp.ne.s32.totalorder %s84, %s87
      %p93 = scmp.eq.s32.totalorder %s11, 0
      %p94 = por %p92, %p93
      %p95 = scmp.ne.s32.totalorder %s84, %s87
      %p96 = scmp.eq.s32.totalorder %s16, 1
      %p97 = por %p95, %p96
      %p98 = scmp.ne.s32.totalorder %s87, %s88
      %p99 = scmp.eq.s32.totalorder %s16, 0
      %p100 = por %p98, %p99
      %p101 = scmp.ne.s32.totalorder %s87, %s88
      %p102 = scmp.eq.s32.totalorder %s17, 1
      %p103 = por %p101, %p102
      %p105 = scmp.ne.s32.totalorder %s88, %s104
      %p106 = scmp.eq.s32.totalorder %s17, 0
      %p107 = por %p105, %p106
      %p108 = scmp.le.s32.totalorder 1, %s11
      %p109 = scmp.lt.s32.totalorder %s11, 3
      %p110 = pnand %p108, %p109
      %p111 = pneg %p110
      // Predicated region
      $region9: #{tpu_custom_call.1} parent=5 // pred_check
        _
      $region10: #{tpu_custom_call.1} parent=5 // pred_check_branch
        %113 = sbr.rel (%p110) target = $region12
      $region11: #{tpu_custom_call.1} parent=5 // pred_region
        %s114 = ssub.s32 %s11, 1
        // Predicated region
        $region13: #{tpu_custom_call.1} parent=11 // pred_check
          %p115 = pneg %p72
        $region14: #{tpu_custom_call.1} parent=11 // pred_check_branch
          %117 = sbr.rel (%p115) target = $region16
        $region15: #{tpu_custom_call.1} parent=11 // pred_region
          _
        $region16: #{tpu_custom_call.1} parent=11 // pred_fallthru
          _
      $region12: #{tpu_custom_call.1} parent=5 // pred_fallthru
        _
      %p118 = scmp.lt.s32.totalorder %s11, 2
      // Predicated region
      $region17: #{tpu_custom_call.1} parent=5 // pred_check
        %p119 = pneg %p118
      $region18: #{tpu_custom_call.1} parent=5 // pred_check_branch
        %121 = sbr.rel (%p119) target = $region20
      $region19: #{tpu_custom_call.1} parent=5 // pred_region
        // Predicated region
        $region21: #{tpu_custom_call.1} parent=19 // pred_check
          %p122 = pneg %p45
        $region22: #{tpu_custom_call.1} parent=19 // pred_check_branch
          %124 = sbr.rel (%p122) target = $region24
        $region23: #{tpu_custom_call.1} parent=19 // pred_region
          %p125 = scmp.lt.s32.totalorder %s18, 1
          %s126 = scalar_select %p125, %s18, 1
          %p127 = scmp.lt.s32.totalorder %s19, 0
          %s128 = scalar_select %p127, %s19, 0
          %s129 = smul.addr %s128, 2
          %s130 = smul.addr %s126, 2
          %s131 = sadd.s32 %s129, %s130
          %s132 = smul.addr %s131, 4
          %s133 = scalar_lea.vmem %s0, %s132
        $region24: #{tpu_custom_call.1} parent=19 // pred_fallthru
          _
      $region20: #{tpu_custom_call.1} parent=5 // pred_fallthru
        _
      %p134 = scmp.le.s32.totalorder 1, %s11
      %p135 = scmp.lt.s32.totalorder %s11, 3
      %p136 = pnand %p134, %p135
      %p137 = pneg %p136
      // Predicated region
      $region25: #{tpu_custom_call.1} parent=5 // pred_check
        _
      $region26: #{tpu_custom_call.1} parent=5 // pred_check_branch
        %139 = sbr.rel (%p136) target = $region28
      $region27: #{tpu_custom_call.1} parent=5 // pred_region
        %s140 = ssub.s32 %s11, 1
        %p141 = scmp.lt.s32.totalorder %s20, 1
        %s142 = scalar_select %p141, %s20, 1
        %p143 = scmp.lt.s32.totalorder %s21, 0
        %s144 = scalar_select %p143, %s21, 0
        %s145 = smul.addr %s144, 2
        %s146 = smul.addr %s142, 2
        %s147 = sadd.s32 %s145, %s146
        %s148 = smul.addr %s147, 4
        %s149 = scalar_lea.vmem %s0, %s148
        %p150 = pneg %p51
        %p151 = pneg %p48
        %p152 = pneg %p72
        %p153 = pneg %p69
        %p154 = pneg %p100
        %p155 = pneg %p97
        %s156 = sand.u32 %s87, 1
        %s157 = scalar_lea.sflag [#allocation3], %s156
        %s158 = sand.u32 %s87, 1
        %s159 = smul.addr %s158, 4
        %s160 = scalar_lea.vmem [#allocation2], %s159
        %p161 = scmp.lt.s32.totalorder %s20, 1
        %s162 = scalar_select %p161, %s20, 1
        %p163 = scmp.lt.s32.totalorder %s21, 0
        %s164 = scalar_select %p163, %s21, 0
        %s165 = smul.addr %s164, 2
        %s166 = smul.addr %s162, 2
        %s167 = sadd.s32 %s165, %s166
        %s168 = smul.addr %s167, 4
        %s169 = scalar_lea.vmem %s0, %s168
        %v170 = vld [vmem:[%s169] sm:$0xff]
        %v171 = vld [vmem:[%s1] sm:$0xff]
        %v172 = vld [vmem:[%s1 + $0x8] sm:$0xff]
        %v173 = vld [vmem:[%s1 + $0x10] sm:$0xff]
        %v174 = vld [vmem:[%s1 + $0x18] sm:$0xff]
        %v175 = vld [vmem:[%s1 + $0x20] sm:$0xff]
        %v176 = vld [vmem:[%s1 + $0x28] sm:$0xff]
        %v177 = vld [vmem:[%s1 + $0x30] sm:$0xff]
        %v178 = vld [vmem:[%s1 + $0x38] sm:$0xff]
        %v179 = vld [vmem:[%s1 + $0x40] sm:$0xff]
        %v180 = vld [vmem:[%s1 + $0x48] sm:$0xff]
        %v181 = vld [vmem:[%s1 + $0x50] sm:$0xff]
        %v182 = vld [vmem:[%s1 + $0x58] sm:$0xff]
        %v183 = vld [vmem:[%s1 + $0x60] sm:$0xff]
        %v184 = vld [vmem:[%s1 + $0x68] sm:$0xff]
        %v185 = vld [vmem:[%s1 + $0x70] sm:$0xff]
        %v186 = vld [vmem:[%s1 + $0x78] sm:$0xff]
        %v187 = vld [vmem:[%s1 + $0x80] sm:$0xff]
        %v188 = vld [vmem:[%s1 + $0x88] sm:$0xff]
        %v189 = vld [vmem:[%s1 + $0x90] sm:$0xff]
        %v190 = vld [vmem:[%s1 + $0x98] sm:$0xff]
        %v191 = vld [vmem:[%s1 + $0xa0] sm:$0xff]
        %v192 = vld [vmem:[%s1 + $0xa8] sm:$0xff]
        %v193 = vld [vmem:[%s1 + $0xb0] sm:$0xff]
        %v194 = vld [vmem:[%s1 + $0xb8] sm:$0xff]
        %v195 = vld [vmem:[%s1 + $0xc0] sm:$0xff]
        %v196 = vld [vmem:[%s1 + $0xc8] sm:$0xff]
        %v197 = vld [vmem:[%s1 + $0xd0] sm:$0xff]
        %v198 = vld [vmem:[%s1 + $0xd8] sm:$0xff]
        %v199 = vld [vmem:[%s1 + $0xe0] sm:$0xff]
        %v200 = vld [vmem:[%s1 + $0xe8] sm:$0xff]
        %v201 = vld [vmem:[%s1 + $0xf0] sm:$0xff]
        %v202 = vld [vmem:[%s1 + $0xf8] sm:$0xff]
        %v204 = vcombine.high %v170, %v170
        %206 = vmatprep.subr.mxu0 0.0
        %207 = vmatpush1.msra.mxu0 %v171
        %208 = vmatprep.subr.mxu0 0.0
        %209 = vmatpush1.msra.mxu0 %v172
        %210 = vmatprep.subr.mxu0 0.0
        %211 = vmatpush1.msra.mxu0 %v173
        %212 = vmatprep.subr.mxu0 0.0
        %213 = vmatpush1.msra.mxu0 %v174
        %214 = vmatprep.subr.mxu0 0.0
        %215 = vmatpush1.msra.mxu0 %v175
        %216 = vmatprep.subr.mxu0 0.0
        %217 = vmatpush1.msra.mxu0 %v176
        %218 = vmatprep.subr.mxu0 0.0
        %219 = vmatpush1.msra.mxu0 %v177
        %220 = vmatprep.subr.mxu0 0.0
        %221 = vmatpush1.msra.mxu0 %v178
        %222 = vmatprep.subr.mxu0 0.0
        %223 = vmatpush1.msra.mxu0 %v179
        %224 = vmatprep.subr.mxu0 0.0
        %225 = vmatpush1.msra.mxu0 %v180
        %226 = vmatprep.subr.mxu0 0.0
        %227 = vmatpush1.msra.mxu0 %v181
        %228 = vmatprep.subr.mxu0 0.0
        %229 = vmatpush1.msra.mxu0 %v182
        %230 = vmatprep.subr.mxu0 0.0
        %231 = vmatpush1.msra.mxu0 %v183
        %232 = vmatprep.subr.mxu0 0.0
        %233 = vmatpush1.msra.mxu0 %v184
        %234 = vmatprep.subr.mxu0 0.0
        %235 = vmatpush1.msra.mxu0 %v185
        %236 = vmatprep.subr.mxu0 0.0
        %237 = vmatpush1.msra.mxu0 %v186
        %238 = vmatprep.subr.mxu0 0.0
        %239 = vmatpush1.msra.mxu0 %v187
        %240 = vmatprep.subr.mxu0 0.0
        %241 = vmatpush1.msra.mxu0 %v188
        %242 = vmatprep.subr.mxu0 0.0
        %243 = vmatpush1.msra.mxu0 %v189
        %244 = vmatprep.subr.mxu0 0.0
        %245 = vmatpush1.msra.mxu0 %v190
        %246 = vmatprep.subr.mxu0 0.0
        %247 = vmatpush1.msra.mxu0 %v191
        %248 = vmatprep.subr.mxu0 0.0
        %249 = vmatpush1.msra.mxu0 %v192
        %250 = vmatprep.subr.mxu0 0.0
        %251 = vmatpush1.msra.mxu0 %v193
        %252 = vmatprep.subr.mxu0 0.0
        %253 = vmatpush1.msra.mxu0 %v194
        %254 = vmatprep.subr.mxu0 0.0
        %255 = vmatpush1.msra.mxu0 %v195
        %256 = vmatprep.subr.mxu0 0.0
        %257 = vmatpush1.msra.mxu0 %v196
        %258 = vmatprep.subr.mxu0 0.0
        %259 = vmatpush1.msra.mxu0 %v197
        %260 = vmatprep.subr.mxu0 0.0
        %261 = vmatpush1.msra.mxu0 %v198
        %262 = vmatprep.subr.mxu0 0.0
        %263 = vmatpush1.msra.mxu0 %v199
        %264 = vmatprep.subr.mxu0 0.0
        %265 = vmatpush1.msra.mxu0 %v200
        %266 = vmatprep.subr.mxu0 0.0
        %267 = vmatpush1.msra.mxu0 %v201
        %268 = vmatprep.subr.mxu0 0.0
        %269 = vmatpush1.msra.mxu0 %v202
        %270 = vmatprep.mubr.f32.mxu0 %v204
        %271 = vmatmul.mubr.f32.gmra.mrb[0].mxu0 %v170
        %v272 = vpop.f32.mrb[0].mxu0
        %v273 = vadd.f32 0.0, %v272
        %v274 = vpop.f32.mrb[0].mxu0
        %275 = vdwg.mxu0
        %vm276 = vcmask 519168
        %277 = vst.msk [vmem:[%s160] sm:$0xf] %vm276, %v273
        %s278 = sand.u32 %s87, 1
        %s279 = scalar_lea.sflag [#allocation3], %s278
        %s280 = sand.u32 %s87, 1
        %s281 = smul.addr %s280, 4
        %s282 = scalar_lea.vmem [#allocation2], %s281
        // Predicated region
        $region29: #{tpu_custom_call.1} parent=27 // pred_check
          %p283 = pneg %p97
        $region30: #{tpu_custom_call.1} parent=27 // pred_check_branch
          %285 = sbr.rel (%p283) target = $region32
        $region31: #{tpu_custom_call.1} parent=27 // pred_region
          %s287 = ssub.s32 64, 64
          %288 = vsyncadd %s279, %s287
          %s289 = sadd.s32 %s21, %s20
          %s290 = smul.addr %s289, 64
          %s291 = scalar_lea.hbm %s2, %s290
          %s293 = sshll.u32 %s282, 4
          %s294 = int_to_ptr.vmem [resolvable:$true] %s293
          %296 = dma.vmem_to_hbm [thread:$0]  %s294, 64, %s291, %s279
        $region32: #{tpu_custom_call.1} parent=27 // pred_fallthru
          _
      $region28: #{tpu_custom_call.1} parent=5 // pred_fallthru
        _
      %p297 = scmp.le.s32.totalorder 2, %s11
      // Predicated region
      $region33: #{tpu_custom_call.1} parent=5 // pred_check
        %p298 = pneg %p297
      $region34: #{tpu_custom_call.1} parent=5 // pred_check_branch
        %300 = sbr.rel (%p298) target = $region36
      $region35: #{tpu_custom_call.1} parent=5 // pred_region
        %s301 = ssub.s32 %s11, 2
        // Predicated region
        $region37: #{tpu_custom_call.1} parent=35 // pred_check
          %p302 = pneg %p103
        $region38: #{tpu_custom_call.1} parent=35 // pred_check_branch
          %304 = sbr.rel (%p302) target = $region40
        $region39: #{tpu_custom_call.1} parent=35 // pred_region
          %s305 = sand.u32 %s88, 1
          %s306 = scalar_lea.sflag [#allocation3], %s305
          %s307 = sand.u32 %s88, 1
          %s308 = smul.addr %s307, 4
          %s309 = scalar_lea.vmem [#allocation2], %s308
          %310 = dma.done %s306, 64
        $region40: #{tpu_custom_call.1} parent=35 // pred_fallthru
          _
      $region36: #{tpu_custom_call.1} parent=5 // pred_fallthru
        _
    $region6: #{tpu_custom_call.1} parent=1 // loop_footer
      %s15 = sadd.s32 1, %s11
    $region7: #{tpu_custom_call.1} parent=1 // loop_footer_branch
      %10 = sbr.rel target = $region3
    $region8: #{tpu_custom_call.1} parent=1 // loop_exit
      _
    %311 = vsyncpa [#allocation3], 1
    %s312 = scalar_lea.sflag [#allocation3], 1
    %313 = vsyncpa %s312, 1

</llo_original>
